<compile_context>
chip_gen: v6e
topology: v6e:2x2x1
jax: 0.10.0
libtpu: 0.0.40
codegen_flags: <defaults>
</compile_context>

<pallas_src>
import functools

import jax
import jax.numpy as jnp
import numpy as np
from jax import lax
from jax.experimental import pallas as pl
from jax.experimental.pallas import tpu as pltpu


def head_seq_kernel(x_ref, w_ref, b_ref, mem_ref, pw_ref, inv_mn_ref, out_ref,
                    carry_ref, wc_ref, aux_ref, *, key_size, shift_size):
    """One (batch_block, time_chunk) tile of the NTM-head recurrence."""
    K, S = key_size, shift_size
    Tc, Bb, H = x_ref.shape
    N = mem_ref.shape[1]
    eps = 1e-8

    # Reset the carried addressing weight at the start of this batch block's
    # time sequence (time axis is grid axis 1).
    @pl.when(pl.program_id(1) == 0)
    def _():
        carry_ref[...] = pw_ref[...]

    # --------------------------------------------------------------------
    # Phase 1: carry-independent work, batched over the whole time chunk.
    # --------------------------------------------------------------------
    x2 = x_ref[...].reshape(Tc * Bb, H)
    # Fused linear (lane-dense 128-wide output), one real MXU matmul per chunk:
    #   columns = [key | beta | blending | shift | gamma | zero-pad]
    z = jnp.dot(x2, w_ref[...], preferred_element_type=jnp.float32) + b_ref[...]
    z = z.reshape(Tc, Bb, -1)

    key = jax.nn.relu(z[..., :K])                               # [Tc,Bb,K]
    beta = jax.nn.softplus(z[..., K:K + 1])                     # [Tc,Bb,1]
    blend = jax.nn.sigmoid(z[..., K + 1:K + 2])                 # [Tc,Bb,1]
    shift_p = jax.nn.softmax(z[..., K + 2:K + 2 + S], axis=-1)  # [Tc,Bb,S]
    gamma = jax.nn.relu(z[..., K + 2 + S:K + 3 + S]) + 1.0      # [Tc,Bb,1]

    mem = mem_ref[...]                                          # [Bb,N,K]
    # Content addressing for all Tc steps at once.  At N=8 / K=16 the VPU
    # broadcast-multiply + lane-reduce beats a degenerate batched matvec.
    dots = jnp.sum(key[:, :, None, :] * mem[None, :, :, :], axis=-1)   # [Tc,Bb,N]
    key_norm = jnp.sqrt(jnp.sum(key * key, axis=-1, keepdims=True))    # [Tc,Bb,1]
    inv_kn = pl.reciprocal(jnp.maximum(key_norm, eps), approx=True)
    cos = dots * inv_kn * inv_mn_ref[...][None]                        # [Tc,Bb,N]
    wc_ref[...] = jax.nn.softmax(beta * cos, axis=-1)                  # [Tc,Bb,N]
    aux_ref[...] = jnp.concatenate([shift_p, blend, gamma], axis=-1)   # [Tc,Bb,S+2]

    # --------------------------------------------------------------------
    # Phase 2: the actual recurrence -- a few tiny VPU/XLU ops per step.
    # --------------------------------------------------------------------
    def step(t, w):
        wcv = wc_ref[t]                          # [Bb,N]  content weights
        av = aux_ref[t]                          # [Bb,S+2]
        bl = av[:, S:S + 1]
        gm = av[:, S + 1:S + 2]

        # interpolation with the carried weight
        w = bl * wcv + (1.0 - bl) * w

        # circular convolutional shift (torch: circular pad 1 + valid conv):
        #   tmp[i] = sum_k shift[k] * w[(i + k - 1) mod N]
        acc = jnp.zeros_like(w)
        for k in range(S):                       # S is small and static
            sh = (1 - k) % N
            wk = w if sh == 0 else pltpu.roll(w, shift=sh, axis=1)
            acc = acc + av[:, k:k + 1] * wk

        # sharpening: w ** gamma, renormalize.
        w = jnp.maximum(acc, 1e-30)              # guard log(0); matches ref at 0
        w = jnp.exp(gm * jnp.log(w))
        # Exact divide: the carried weight must sum to 1 with no drift.
        w = w / jnp.sum(w, axis=1, keepdims=True)

        out_ref[t] = w
        return w

    w_final = lax.fori_loop(0, Tc, step, carry_ref[...], unroll=True)
    carry_ref[...] = w_final                     # carry into the next chunk


def head_forward_seq(xs, memory, prev_weight, W_all, b_all, *,
                     key_size, shift_size, time_chunk=None):
    """Fused NTM-head recurrence over a sequence.

    xs          : [T, B, H]
    memory      : [B, N, K]   (constant over the sequence)
    prev_weight : [B, N]      (initial addressing weight)
    returns     : [T, B, N]   (addressing weight after every step)
    """
    f32 = jnp.float32
    xs = xs.astype(f32)
    memory = memory.astype(f32)
    prev_weight = prev_weight.astype(f32)
    W_all = W_all.astype(f32)
    b_all = b_all.astype(f32)

    T, B, H = xs.shape
    N, K = memory.shape[1], memory.shape[2]
    S = shift_size
    eps = 1e-8

    # --- densify batch: pad to a sublane multiple (8); one batch block = 8 ---
    Bb = 8
    Bp = pl.cdiv(B, Bb) * Bb
    if Bp != B:
        pad = Bp - B
        xs = jnp.pad(xs, ((0, 0), (0, pad), (0, 0)))
        memory = jnp.pad(memory, ((0, pad), (0, 0), (0, 0)))
        # Uniform weights in padded rows keep every op finite.
        prev_weight = jnp.pad(prev_weight, ((0, pad), (0, 0)),
                              constant_values=1.0 / N)
    nb = Bp // Bb

    # --- time chunking: amortize grid/pipeline overhead over Tc steps -------
    Tc = T if time_chunk is None else max(1, min(int(time_chunk), T))
    Tpad = pl.cdiv(T, Tc) * Tc
    if Tpad != T:
        xs = jnp.pad(xs, ((0, Tpad - T), (0, 0), (0, 0)))
    nc = Tpad // Tc

    # --- densify: pad fused linear output to 128 lanes -----------------------
    C = W_all.shape[1]
    Cp = pl.cdiv(C, 128) * 128
    if Cp != C:
        W_all = jnp.pad(W_all, ((0, 0), (0, Cp - C)))
        b_all = jnp.pad(b_all, ((0, 0), (0, Cp - C)))

    # --- memory norms hoisted out of the recurrence (exact divide, once) ----
    inv_mem_norm = 1.0 / jnp.maximum(
        jnp.sqrt(jnp.sum(memory * memory, axis=-1)), eps)            # [Bp, N]

    kernel = functools.partial(head_seq_kernel, key_size=key_size,
                               shift_size=shift_size)

    out = pl.pallas_call(
        kernel,
        out_shape=jax.ShapeDtypeStruct((Tpad, Bp, N), f32),
        grid_spec=pltpu.PrefetchScalarGridSpec(
            num_scalar_prefetch=0,
            grid=(nb, nc),
            in_specs=[
                pl.BlockSpec((Tc, Bb, H), lambda b, c: (c, b, 0)),   # x chunk
                pl.BlockSpec((H, Cp), lambda b, c: (0, 0)),          # W (resident)
                pl.BlockSpec((1, Cp), lambda b, c: (0, 0)),          # b (resident)
                pl.BlockSpec((Bb, N, K), lambda b, c: (b, 0, 0)),    # memory
                pl.BlockSpec((Bb, N), lambda b, c: (b, 0)),          # prev_weight
                pl.BlockSpec((Bb, N), lambda b, c: (b, 0)),          # 1/||mem||
            ],
            out_specs=pl.BlockSpec((Tc, Bb, N), lambda b, c: (c, b, 0)),
            scratch_shapes=[
                pltpu.VMEM((Bb, N), f32),            # carried addressing weight
                pltpu.VMEM((Tc, Bb, N), f32),        # hoisted content weights
                pltpu.VMEM((Tc, Bb, S + 2), f32),    # hoisted [shift|blend|gamma]
            ],
        ),
        compiler_params=pltpu.CompilerParams(
            # Independent batch rows -> parallel (both v7x TensorCores);
            # sequential carry through scratch -> time axis is arbitrary.
            dimension_semantics=("parallel", "arbitrary"),
            # Stays well under v7x's 64 MiB physical VMEM per TensorCore.
            vmem_limit_bytes=32 * 1024 * 1024,
        ),
    )(xs, W_all, b_all, memory, prev_weight, inv_mem_norm)

    return out[:T, :B, :]


def head_forward(x, memory, prev_weight, W_all, b_all, *, key_size, shift_size):
    """Single-step forward, equivalent to Head.forward(x, memory, prev_weight)."""
    out = head_forward_seq(x[None], memory, prev_weight, W_all, b_all,
                           key_size=key_size, shift_size=shift_size)
    return out[0]


def head_reference(x, memory, prev_weight, W_all, b_all, *, key_size, shift_size):
    """Pure-JAX reference mirroring the PyTorch forward pass."""
    K, S = key_size, shift_size
    z = x @ W_all + b_all
    key = jax.nn.relu(z[:, :K])
    beta = jax.nn.softplus(z[:, K:K + 1])
    blend = jax.nn.sigmoid(z[:, K + 1:K + 2])
    shift = jax.nn.softmax(z[:, K + 2:K + 2 + S], axis=1)
    gamma = jax.nn.relu(z[:, K + 2 + S:K + 3 + S]) + 1.0

    eps = 1e-8
    dots = jnp.sum(key[:, None, :] * memory, axis=-1)
    kn = jnp.sqrt(jnp.sum(key * key, axis=-1, keepdims=True))
    mn = jnp.sqrt(jnp.sum(memory * memory, axis=-1))
    cos = dots / (jnp.maximum(kn, eps) * jnp.maximum(mn, eps))
    w = jax.nn.softmax(beta * cos, axis=1)
    w = blend * w + (1.0 - blend) * prev_weight
    N = w.shape[1]
    padded = jnp.concatenate([w[:, -1:], w, w[:, :1]], axis=1)
    acc = jnp.zeros_like(w)
    for k in range(S):
        acc = acc + padded[:, k:k + N] * shift[:, k:k + 1]
    w = acc ** gamma
    return w / jnp.sum(w, axis=1, keepdims=True)


def init_params(key, hidden_size, key_size, shift_range):
    """Deterministic synthetic init mimicking the module's Xavier-style init.

    Weights stored fused and transposed to (in, out):
      columns [0:K]       fc_key
      column  [K]         fc_beta
      column  [K+1]       fc_blending
      columns [K+2:K+2+S] fc_shift
      column  [K+2+S]     fc_gamma
    """
    S = 2 * shift_range + 1
    ks = jax.random.split(key, 5)

    def xavier_normal(k, fan_in, fan_out):
        std = float(np.sqrt(2.0 / (fan_in + fan_out)))
        return std * jax.random.normal(k, (fan_in, fan_out), jnp.float32)

    def xavier_uniform(k, fan_in, fan_out):
        lim = float(np.sqrt(6.0 / (fan_in + fan_out)))
        return jax.random.uniform(k, (fan_in, fan_out), jnp.float32, -lim, lim)

    W_key = xavier_normal(ks[0], hidden_size, key_size)
    W_beta = xavier_uniform(ks[1], hidden_size, 1)
    W_blend = xavier_uniform(ks[2], hidden_size, 1)
    W_shift = xavier_uniform(ks[3], hidden_size, S)
    W_gamma = xavier_normal(ks[4], hidden_size, 1)

    W_all = jnp.concatenate([W_key, W_beta, W_blend, W_shift, W_gamma], axis=1)
    b_all = jnp.zeros((1, W_all.shape[1]), jnp.float32)  # all biases init to 0
    return W_all, b_all


if __name__ == "__main__":
    # Small shapes: batch=2, hidden=32, memory slots (weight_size)=8,
    # key_size=16, shift_range=1 (shift kernel size 3), T=6 timesteps.
    B, H, N, K, R = 2, 32, 8, 16, 1
    S = 2 * R + 1
    T = 6

    root = jax.random.PRNGKey(0)
    k_x, k_mem, k_pw, k_par = jax.random.split(root, 4)

    xs = jax.random.normal(k_x, (T, B, H), jnp.float32)
    memory = jax.random.normal(k_mem, (B, N, K), jnp.float32)
    prev_weight = jax.nn.softmax(jax.random.normal(k_pw, (B, N), jnp.float32),
                                 axis=1)
    W_all, b_all = init_params(k_par, H, K, R)

    # --- single step: exactly Head.forward(x, memory, prev_weight) ----------
    out1 = head_forward(xs[0], memory, prev_weight, W_all, b_all,
                        key_size=K, shift_size=S)
    out1 = jax.block_until_ready(out1)
    ref1 = head_reference(xs[0], memory, prev_weight, W_all, b_all,
                          key_size=K, shift_size=S)
    np.testing.assert_allclose(np.asarray(out1), np.asarray(ref1),
                               rtol=5e-3, atol=2e-3)

    # --- fused multi-step recurrence: one pallas_call for all T steps -------
    outs = head_forward_seq(xs, memory, prev_weight, W_all, b_all,
                            key_size=K, shift_size=S)
    outs = jax.block_until_ready(outs)

    refs = []
    wp = prev_weight
    for t in range(T):
        wp = head_reference(xs[t], memory, wp, W_all, b_all,
                            key_size=K, shift_size=S)
        refs.append(wp)
    refs = jnp.stack(refs)
    np.testing.assert_allclose(np.asarray(outs), np.asarray(refs),
                               rtol=5e-3, atol=3e-3)

    print("KERNEL_OK")
</pallas_src>

<mosaic_0001>
module attributes {stable_mosaic.version = 11 : i64} {
  func.func @head_seq_kernel(%arg0: i32, %arg1: i32, %arg2: memref<1x8x32xf32, #tpu.memory_space<vmem>>, %arg3: memref<32x128xf32, #tpu.memory_space<vmem>>, %arg4: memref<1x128xf32, #tpu.memory_space<vmem>>, %arg5: memref<8x8x16xf32, #tpu.memory_space<vmem>>, %arg6: memref<8x8xf32, #tpu.memory_space<vmem>>, %arg7: memref<8x8xf32, #tpu.memory_space<vmem>>, %arg8: memref<1x8x8xf32, #tpu.memory_space<vmem>>, %arg9: memref<8x8xf32, #tpu.memory_space<vmem>>, %arg10: memref<1x8x8xf32, #tpu.memory_space<vmem>>, %arg11: memref<1x8x5xf32, #tpu.memory_space<vmem>>) attributes {dimension_semantics = [#tpu.dimension_semantics<parallel>, #tpu.dimension_semantics<arbitrary>], iteration_bounds = array<i64: 1, 1>, scalar_prefetch = 0 : i64, scratch_operands = 3 : i64, tpu.core_type = #tpu.core_type<tc>, window_params = [{transform_indices = @transform_0, window_bounds = array<i64: 1, 8, 32>}, {pipeline_mode = #tpu.pipeline_mode<synchronous>, transform_indices = @transform_1, window_bounds = array<i64: 32, 128>}, {pipeline_mode = #tpu.pipeline_mode<synchronous>, transform_indices = @transform_2, window_bounds = array<i64: 1, 128>}, {transform_indices = @transform_3, window_bounds = array<i64: 8, 8, 16>}, {transform_indices = @transform_4, window_bounds = array<i64: 8, 8>}, {transform_indices = @transform_5, window_bounds = array<i64: 8, 8>}, {transform_indices = @transform_6, window_bounds = array<i64: 1, 8, 8>}]} {
    %c0_i32 = arith.constant 0 : i32
    %0 = arith.cmpi eq, %arg1, %c0_i32 : i32
    %1 = arith.extui %0 : i1 to i32
    %c0_i32_0 = arith.constant 0 : i32
    %2 = arith.cmpi ne, %1, %c0_i32_0 : i32
    scf.if %2 {
      %c0_49 = arith.constant 0 : index
      %c0_50 = arith.constant 0 : index
      %132 = vector.load %arg6[%c0_49, %c0_50] : memref<8x8xf32, #tpu.memory_space<vmem>>, vector<8x8xf32>
      %c0_51 = arith.constant 0 : index
      %c0_52 = arith.constant 0 : index
      %133 = vector.load %arg9[%c0_51, %c0_52] : memref<8x8xf32, #tpu.memory_space<vmem>>, vector<8x8xf32>
      tpu.vector_store %arg9[%c0_51, %c0_52], %132 {strides = array<i32>} : memref<8x8xf32, #tpu.memory_space<vmem>>, vector<8x8xf32>,
    } else {
    }
    %c0 = arith.constant 0 : index
    %c0_1 = arith.constant 0 : index
    %c0_2 = arith.constant 0 : index
    %3 = vector.load %arg2[%c0, %c0_1, %c0_2] : memref<1x8x32xf32, #tpu.memory_space<vmem>>, vector<1x8x32xf32>
    %4 = vector.shape_cast %3 : vector<1x8x32xf32> to vector<8x32xf32>
    %c0_3 = arith.constant 0 : index
    %c0_4 = arith.constant 0 : index
    %5 = vector.load %arg3[%c0_3, %c0_4] : memref<32x128xf32, #tpu.memory_space<vmem>>, vector<32x128xf32>
    %cst = arith.constant dense<0.000000e+00> : vector<8x128xf32>
    %6 = tpu.matmul %4, %5, %cst {dimension_numbers = #tpu.dot_dimension_numbers<[1], [0], [0], [1], [0, 0, 1, 1], [], []>} : vector<8x32xf32>, vector<32x128xf32>, vector<8x128xf32> -> vector<8x128xf32>
    %c0_5 = arith.constant 0 : index
    %c0_6 = arith.constant 0 : index
    %7 = vector.load %arg4[%c0_5, %c0_6] : memref<1x128xf32, #tpu.memory_space<vmem>>, vector<1x128xf32>
    %8 = vector.broadcast %7 : vector<1x128xf32> to vector<8x128xf32>
    %9 = arith.addf %6, %8 : vector<8x128xf32>
    %10 = vector.shape_cast %9 : vector<8x128xf32> to vector<1x8x128xf32>
    %11 = vector.extract_strided_slice %10 {offsets = [0, 0, 0], sizes = [1, 8, 16], strides = [1, 1, 1]} : vector<1x8x128xf32> to vector<1x8x16xf32>
    %cst_7 = arith.constant 0.000000e+00 : f32
    %12 = vector.broadcast %cst_7 : f32 to vector<1x8x16xf32>
    %13 = arith.maximumf %11, %12 : vector<1x8x16xf32>
    %14 = vector.extract_strided_slice %10 {offsets = [0, 0, 16], sizes = [1, 8, 1], strides = [1, 1, 1]} : vector<1x8x128xf32> to vector<1x8x1xf32>
    %cst_8 = arith.constant 0.000000e+00 : f32
    %15 = vector.broadcast %cst_8 : f32 to vector<1x8x1xf32>
    %16 = arith.maximumf %14, %15 : vector<1x8x1xf32>
    %17 = vector.broadcast %cst_8 : f32 to vector<1x8x1xf32>
    %18 = arith.subf %14, %17 : vector<1x8x1xf32>
    %19 = arith.cmpf one, %18, %18 : vector<1x8x1xf32>
    %20 = vector.broadcast %cst_8 : f32 to vector<1x8x1xf32>
    %21 = arith.addf %14, %20 : vector<1x8x1xf32>
    %22 = math.absf %18 : vector<1x8x1xf32>
    %cst_9 = arith.constant 0.000000e+00 : f32
    %23 = vector.broadcast %cst_9 : f32 to vector<1x8x1xf32>
    %24 = arith.subf %23, %22 : vector<1x8x1xf32>
    %25 = math.exp %24 : vector<1x8x1xf32>
    %26 = math.log1p %25 : vector<1x8x1xf32>
    %27 = arith.addf %16, %26 : vector<1x8x1xf32>
    %28 = arith.select %19, %21, %27 : vector<1x8x1xi1>, vector<1x8x1xf32>
    %29 = vector.extract_strided_slice %10 {offsets = [0, 0, 17], sizes = [1, 8, 1], strides = [1, 1, 1]} : vector<1x8x128xf32> to vector<1x8x1xf32>
    %30 = arith.negf %29 : vector<1x8x1xf32>
    %31 = math.exp %30 : vector<1x8x1xf32>
    %cst_10 = arith.constant 1.000000e+00 : f32
    %32 = vector.broadcast %cst_10 : f32 to vector<1x8x1xf32>
    %33 = arith.addf %32, %31 : vector<1x8x1xf32>
    %34 = arith.divf %32, %33 : vector<1x8x1xf32>
    %35 = vector.extract_strided_slice %10 {offsets = [0, 0, 18], sizes = [1, 8, 3], strides = [1, 1, 1]} : vector<1x8x128xf32> to vector<1x8x3xf32>
    %cst_11 = arith.constant dense<0xFF800000> : vector<1x8xf32>
    %36 = vector.multi_reduction <maximumf>, %35, %cst_11 [2] : vector<1x8x3xf32> to vector<1x8xf32>
    %cst_12 = arith.constant 0xFF800000 : f32
    %37 = vector.broadcast %cst_12 : f32 to vector<1x8xf32>
    %38 = arith.maximumf %37, %36 : vector<1x8xf32>
    %39 = vector.shape_cast %38 : vector<1x8xf32> to vector<1x8x1xf32>
    %40 = vector.broadcast %39 : vector<1x8x1xf32> to vector<1x8x3xf32>
    %41 = arith.subf %35, %40 : vector<1x8x3xf32>
    %42 = math.exp %41 : vector<1x8x3xf32>
    %cst_13 = arith.constant dense<0.000000e+00> : vector<1x8xf32>
    %43 = vector.multi_reduction <add>, %42, %cst_13 [2] : vector<1x8x3xf32> to vector<1x8xf32>
    %44 = vector.shape_cast %43 : vector<1x8xf32> to vector<1x8x1xf32>
    %45 = vector.broadcast %44 : vector<1x8x1xf32> to vector<1x8x3xf32>
    %46 = arith.divf %42, %45 : vector<1x8x3xf32>
    %47 = vector.extract_strided_slice %10 {offsets = [0, 0, 21], sizes = [1, 8, 1], strides = [1, 1, 1]} : vector<1x8x128xf32> to vector<1x8x1xf32>
    %cst_14 = arith.constant 0.000000e+00 : f32
    %48 = vector.broadcast %cst_14 : f32 to vector<1x8x1xf32>
    %49 = arith.maximumf %47, %48 : vector<1x8x1xf32>
    %cst_15 = arith.constant 1.000000e+00 : f32
    %50 = vector.broadcast %cst_15 : f32 to vector<1x8x1xf32>
    %51 = arith.addf %49, %50 : vector<1x8x1xf32>
    %c0_16 = arith.constant 0 : index
    %c0_17 = arith.constant 0 : index
    %c0_18 = arith.constant 0 : index
    %52 = vector.load %arg5[%c0_16, %c0_17, %c0_18] : memref<8x8x16xf32, #tpu.memory_space<vmem>>, vector<8x8x16xf32>
    %53 = vector.shape_cast %13 : vector<1x8x16xf32> to vector<1x8x1x16xf32>
    %54 = vector.shape_cast %52 : vector<8x8x16xf32> to vector<1x8x8x16xf32>
    %55 = vector.broadcast %53 : vector<1x8x1x16xf32> to vector<1x8x8x16xf32>
    %56 = arith.mulf %55, %54 : vector<1x8x8x16xf32>
    %cst_19 = arith.constant dense<0.000000e+00> : vector<1x8x8xf32>
    %57 = vector.multi_reduction <add>, %56, %cst_19 [3] : vector<1x8x8x16xf32> to vector<1x8x8xf32>
    %58 = arith.mulf %13, %13 : vector<1x8x16xf32>
    %cst_20 = arith.constant dense<0.000000e+00> : vector<1x8xf32>
    %59 = vector.multi_reduction <add>, %58, %cst_20 [2] : vector<1x8x16xf32> to vector<1x8xf32>
    %60 = vector.shape_cast %59 : vector<1x8xf32> to vector<1x8x1xf32>
    %61 = math.sqrt %60 : vector<1x8x1xf32>
    %cst_21 = arith.constant 9.99999993E-9 : f32
    %62 = vector.broadcast %cst_21 : f32 to vector<1x8x1xf32>
    %63 = arith.maximumf %61, %62 : vector<1x8x1xf32>
    %64 = tpu.reciprocal %63 {approx = true} : vector<1x8x1xf32> -> vector<1x8x1xf32>
    %65 = vector.broadcast %64 : vector<1x8x1xf32> to vector<1x8x8xf32>
    %66 = arith.mulf %57, %65 : vector<1x8x8xf32>
    %c0_22 = arith.constant 0 : index
    %c0_23 = arith.constant 0 : index
    %67 = vector.load %arg7[%c0_22, %c0_23] : memref<8x8xf32, #tpu.memory_space<vmem>>, vector<8x8xf32>
    %68 = vector.shape_cast %67 : vector<8x8xf32> to vector<1x8x8xf32>
    %69 = arith.mulf %66, %68 : vector<1x8x8xf32>
    %70 = vector.broadcast %28 : vector<1x8x1xf32> to vector<1x8x8xf32>
    %71 = arith.mulf %70, %69 : vector<1x8x8xf32>
    %cst_24 = arith.constant dense<0xFF800000> : vector<1x8xf32>
    %72 = vector.multi_reduction <maximumf>, %71, %cst_24 [2] : vector<1x8x8xf32> to vector<1x8xf32>
    %cst_25 = arith.constant 0xFF800000 : f32
    %73 = vector.broadcast %cst_25 : f32 to vector<1x8xf32>
    %74 = arith.maximumf %73, %72 : vector<1x8xf32>
    %75 = vector.shape_cast %74 : vector<1x8xf32> to vector<1x8x1xf32>
    %76 = vector.broadcast %75 : vector<1x8x1xf32> to vector<1x8x8xf32>
    %77 = arith.subf %71, %76 : vector<1x8x8xf32>
    %78 = math.exp %77 : vector<1x8x8xf32>
    %cst_26 = arith.constant dense<0.000000e+00> : vector<1x8xf32>
    %79 = vector.multi_reduction <add>, %78, %cst_26 [2] : vector<1x8x8xf32> to vector<1x8xf32>
    %80 = vector.shape_cast %79 : vector<1x8xf32> to vector<1x8x1xf32>
    %81 = vector.broadcast %80 : vector<1x8x1xf32> to vector<1x8x8xf32>
    %82 = arith.divf %78, %81 : vector<1x8x8xf32>
    %c0_27 = arith.constant 0 : index
    %c0_28 = arith.constant 0 : index
    %c0_29 = arith.constant 0 : index
    %83 = vector.load %arg10[%c0_27, %c0_28, %c0_29] : memref<1x8x8xf32, #tpu.memory_space<vmem>>, vector<1x8x8xf32>
    tpu.vector_store %arg10[%c0_27, %c0_28, %c0_29], %82 {strides = array<i32>} : memref<1x8x8xf32, #tpu.memory_space<vmem>>, vector<1x8x8xf32>,
    %84 = tpu.concatenate %46, %34, %51 in 2 : vector<1x8x3xf32>, vector<1x8x1xf32>, vector<1x8x1xf32> -> vector<1x8x5xf32>
    %c0_30 = arith.constant 0 : index
    %c0_31 = arith.constant 0 : index
    %c0_32 = arith.constant 0 : index
    %85 = vector.load %arg11[%c0_30, %c0_31, %c0_32] : memref<1x8x5xf32, #tpu.memory_space<vmem>>, vector<1x8x5xf32>
    tpu.vector_store %arg11[%c0_30, %c0_31, %c0_32], %84 {strides = array<i32>} : memref<1x8x5xf32, #tpu.memory_space<vmem>>, vector<1x8x5xf32>,
    %c0_33 = arith.constant 0 : index
    %c0_34 = arith.constant 0 : index
    %86 = vector.load %arg9[%c0_33, %c0_34] : memref<8x8xf32, #tpu.memory_space<vmem>>, vector<8x8xf32>
    %c0_i32_35 = arith.constant 0 : i32
    %87 = arith.index_cast %c0_i32_35 : i32 to index
    %c0_36 = arith.constant 0 : index
    %c0_37 = arith.constant 0 : index
    %88 = vector.load %arg10[%87, %c0_36, %c0_37] : memref<1x8x8xf32, #tpu.memory_space<vmem>>, vector<1x8x8xf32>
    %89 = vector.shape_cast %88 : vector<1x8x8xf32> to vector<8x8xf32>
    %90 = arith.index_cast %c0_i32_35 : i32 to index
    %c0_38 = arith.constant 0 : index
    %c0_39 = arith.constant 0 : index
    %91 = vector.load %arg11[%90, %c0_38, %c0_39] : memref<1x8x5xf32, #tpu.memory_space<vmem>>, vector<1x8x5xf32>
    %92 = vector.shape_cast %91 : vector<1x8x5xf32> to vector<8x5xf32>
    %93 = vector.extract_strided_slice %92 {offsets = [0, 3], sizes = [8, 1], strides = [1, 1]} : vector<8x5xf32> to vector<8x1xf32>
    %94 = vector.extract_strided_slice %92 {offsets = [0, 4], sizes = [8, 1], strides = [1, 1]} : vector<8x5xf32> to vector<8x1xf32>
    %95 = vector.broadcast %93 : vector<8x1xf32> to vector<8x8xf32>
    %96 = arith.mulf %95, %89 : vector<8x8xf32>
    %cst_40 = arith.constant 1.000000e+00 : f32
    %97 = vector.broadcast %cst_40 : f32 to vector<8x1xf32>
    %98 = arith.subf %97, %93 : vector<8x1xf32>
    %99 = vector.broadcast %98 : vector<8x1xf32> to vector<8x8xf32>
    %100 = arith.mulf %99, %86 : vector<8x8xf32>
    %101 = arith.addf %96, %100 : vector<8x8xf32>
    %cst_41 = arith.constant 0.000000e+00 : f32
    %102 = vector.broadcast %cst_41 : f32 to vector<8x8xf32>
    %c1_i32 = arith.constant 1 : i32
    %103 = tpu.dynamic_rotate %101 by %c1_i32 dim 1 : vector<8x8xf32>, i32 -> vector<8x8xf32>
    %104 = vector.extract_strided_slice %92 {offsets = [0, 0], sizes = [8, 1], strides = [1, 1]} : vector<8x5xf32> to vector<8x1xf32>
    %105 = vector.broadcast %104 : vector<8x1xf32> to vector<8x8xf32>
    %106 = arith.mulf %105, %103 : vector<8x8xf32>
    %107 = arith.addf %102, %106 : vector<8x8xf32>
    %108 = vector.extract_strided_slice %92 {offsets = [0, 1], sizes = [8, 1], strides = [1, 1]} : vector<8x5xf32> to vector<8x1xf32>
    %109 = vector.broadcast %108 : vector<8x1xf32> to vector<8x8xf32>
    %110 = arith.mulf %109, %101 : vector<8x8xf32>
    %111 = arith.addf %107, %110 : vector<8x8xf32>
    %c7_i32 = arith.constant 7 : i32
    %112 = tpu.dynamic_rotate %101 by %c7_i32 dim 1 : vector<8x8xf32>, i32 -> vector<8x8xf32>
    %113 = vector.extract_strided_slice %92 {offsets = [0, 2], sizes = [8, 1], strides = [1, 1]} : vector<8x5xf32> to vector<8x1xf32>
    %114 = vector.broadcast %113 : vector<8x1xf32> to vector<8x8xf32>
    %115 = arith.mulf %114, %112 : vector<8x8xf32>
    %116 = arith.addf %111, %115 : vector<8x8xf32>
    %cst_42 = arith.constant 1.000000e-30 : f32
    %117 = vector.broadcast %cst_42 : f32 to vector<8x8xf32>
    %118 = arith.maximumf %116, %117 : vector<8x8xf32>
    %119 = math.log %118 : vector<8x8xf32>
    %120 = vector.broadcast %94 : vector<8x1xf32> to vector<8x8xf32>
    %121 = arith.mulf %120, %119 : vector<8x8xf32>
    %122 = math.exp %121 : vector<8x8xf32>
    %cst_43 = arith.constant dense<0.000000e+00> : vector<8xf32>
    %123 = vector.multi_reduction <add>, %122, %cst_43 [1] : vector<8x8xf32> to vector<8xf32>
    %124 = vector.shape_cast %123 : vector<8xf32> to vector<8x1xf32>
    %125 = vector.broadcast %124 : vector<8x1xf32> to vector<8x8xf32>
    %126 = arith.divf %122, %125 : vector<8x8xf32>
    %127 = arith.index_cast %c0_i32_35 : i32 to index
    %c0_44 = arith.constant 0 : index
    %c0_45 = arith.constant 0 : index
    %128 = vector.load %arg8[%127, %c0_44, %c0_45] : memref<1x8x8xf32, #tpu.memory_space<vmem>>, vector<1x8x8xf32>
    %129 = vector.shape_cast %128 : vector<1x8x8xf32> to vector<8x8xf32>
    %130 = vector.shape_cast %126 : vector<8x8xf32> to vector<1x8x8xf32>
    tpu.vector_store %arg8[%127, %c0_44, %c0_45], %130 {strides = array<i32>} : memref<1x8x8xf32, #tpu.memory_space<vmem>>, vector<1x8x8xf32>,
    %c1_i32_46 = arith.constant 1 : i32
    %c0_47 = arith.constant 0 : index
    %c0_48 = arith.constant 0 : index
    %131 = vector.load %arg9[%c0_47, %c0_48] : memref<8x8xf32, #tpu.memory_space<vmem>>, vector<8x8xf32>
    tpu.vector_store %arg9[%c0_47, %c0_48], %126 {strides = array<i32>} : memref<8x8xf32, #tpu.memory_space<vmem>>, vector<8x8xf32>,
    return
  }
  func.func @transform_0(%arg0: i32, %arg1: i32) -> (i32, i32, i32) {
    %c0_i32 = arith.constant 0 : i32
    %c0_i32_0 = arith.constant 0 : i32
    return %arg1, %arg0, %c0_i32 : i32, i32, i32
  }
  func.func @transform_1(%arg0: i32, %arg1: i32) -> (i32, i32) {
    %c0_i32 = arith.constant 0 : i32
    %c0_i32_0 = arith.constant 0 : i32
    %c0_i32_1 = arith.constant 0 : i32
    return %c0_i32, %c0_i32_0 : i32, i32
  }
  func.func @transform_2(%arg0: i32, %arg1: i32) -> (i32, i32) {
    %c0_i32 = arith.constant 0 : i32
    %c0_i32_0 = arith.constant 0 : i32
    %c0_i32_1 = arith.constant 0 : i32
    return %c0_i32, %c0_i32_0 : i32, i32
  }
  func.func @transform_3(%arg0: i32, %arg1: i32) -> (i32, i32, i32) {
    %c0_i32 = arith.constant 0 : i32
    %c0_i32_0 = arith.constant 0 : i32
    %c0_i32_1 = arith.constant 0 : i32
    return %arg0, %c0_i32, %c0_i32_0 : i32, i32, i32
  }
  func.func @transform_4(%arg0: i32, %arg1: i32) -> (i32, i32) {
    %c0_i32 = arith.constant 0 : i32
    %c0_i32_0 = arith.constant 0 : i32
    return %arg0, %c0_i32 : i32, i32
  }
  func.func @transform_5(%arg0: i32, %arg1: i32) -> (i32, i32) {
    %c0_i32 = arith.constant 0 : i32
    %c0_i32_0 = arith.constant 0 : i32
    return %arg0, %c0_i32 : i32, i32
  }
  func.func @transform_6(%arg0: i32, %arg1: i32) -> (i32, i32, i32) {
    %c0_i32 = arith.constant 0 : i32
    %c0_i32_0 = arith.constant 0 : i32
    return %arg1, %arg0, %c0_i32 : i32, i32, i32
  }
}

</mosaic_0001>

<llo_original>
// kernel: tpu_custom_call.1
$region0: #{tpu_custom_call.1}
  #allocation0 [shape = 'u32[]', space=smem, size = 0x4, offset = 0x4, fixed_abs, tag = 'smem constant byte address 0x4 - core index']
  #allocation1 [shape = 'u32[144,128]{1,0:T(1,128)}', space=vmem, size = 0x12000, scoped, tag = 'internal scratch']
  #allocation2 [shape = 'f32[8,8]{1,0:T(8,128)}', space=vmem, size = 0x1000, scoped, tag = 'scratch operand']
  #allocation3 [shape = 'f32[1,8,8]{2,1,0:T(8,128)}', space=vmem, size = 0x1000, scoped, tag = 'scratch operand']
  #allocation4 [shape = 'f32[1,8,5]{2,1,0:T(8,128)}', space=vmem, size = 0x1000, scoped, tag = 'scratch operand']
  %s0 = inlined_call_operand.hbm [shape: f32[1,8,32], index: 0, kind: input, shape index: {}]
  %s1 = inlined_call_operand.hbm [shape: f32[32,128], index: 1, kind: input, shape index: {}]
  %s2 = inlined_call_operand.vmem [shape: f32[1,128], index: 2, kind: input, shape index: {}]
  %s3 = inlined_call_operand.hbm [shape: f32[8,8,16], index: 3, kind: input, shape index: {}]
  %s4 = inlined_call_operand.hbm [shape: f32[8,8], index: 4, kind: input, shape index: {}]
  %s5 = inlined_call_operand.vmem [shape: f32[8,8], index: 5, kind: input, shape index: {}]
  %s6 = inlined_call_operand.hbm [shape: f32[1,8,8], index: 6, kind: output, shape index: {}]
  %s7 = sld [smem:[#allocation0]]
  $region54: #{tpu_custom_call.1} parent=0
    _
  %s9 = ssub.s32 1, %s7
  %s10 = scalar_select 0, %s9, %s7
  $region1: #{tpu_custom_call.1} parent=0
    #allocation5 [shape = 'u8[4096]{0}', space=vmem, size = 0x1000, scoped, tag = 'input window, operand 0, single buffered']
    #allocation6 [shape = 's32[1]{0}', space=sflag, size = 0x4, scoped, tag = 'scoped memory for tpu_custom_call.1']
    #allocation7 [shape = 's32[1]{0}', space=sflag, size = 0x4, scoped, tag = 'scoped memory for tpu_custom_call.1']
    #allocation8 [shape = 'u8[16384]{0}', space=vmem, size = 0x4000, scoped, tag = 'input window, operand 1, single buffered']
    #allocation9 [shape = 's32[1]{0}', space=sflag, size = 0x4, scoped, tag = 'scoped memory for tpu_custom_call.1']
    #allocation10 [shape = 'u8[32768]{0}', space=vmem, size = 0x8000, scoped, tag = 'input window, operand 3, single buffered']
    #allocation11 [shape = 'u8[4096]{0}', space=vmem, size = 0x1000, scoped, tag = 'input window, operand 4, single buffered']
    #allocation12 [shape = 's32[1]{0}', space=sflag, size = 0x4, scoped, tag = 'scoped memory for tpu_custom_call.1']
    #allocation13 [shape = 'u8[4096]{0}', space=vmem, size = 0x1000, scoped, tag = 'output window, operand 0, single buffered']
    %11 = vsyncpa [#allocation6], 0
    %12 = vsyncpa [#allocation9], 0
    %13 = vsyncpa [#allocation12], 0
    %14 = vsyncpa [#allocation7], 0
    // Predicated region
    $region2: #{tpu_custom_call.1} parent=1 // pred_check
      _
    $region3: #{tpu_custom_call.1} parent=1 // pred_check_branch
      %16 = sbr.rel (0) target = $region5
    $region4: #{tpu_custom_call.1} parent=1 // pred_region
      %s18 = ssub.s32 128, 128
      %19 = vsyncadd [#allocation6], %s18
      %s21 = sshll.u32 [#allocation5], 4
      %s22 = int_to_ptr.vmem [resolvable:$true] %s21
      %24 = dma.hbm_to_vmem [thread:$0]  %s0, 128, %s22, [#allocation6]
    $region5: #{tpu_custom_call.1} parent=1 // pred_fallthru
      _
    // Predicated region
    $region6: #{tpu_custom_call.1} parent=1 // pred_check
      _
    $region7: #{tpu_custom_call.1} parent=1 // pred_check_branch
      %26 = sbr.rel (0) target = $region9
    $region8: #{tpu_custom_call.1} parent=1 // pred_region
      %s28 = ssub.s32 512, 512
      %29 = vsyncadd [#allocation9], %s28
      %s30 = sshll.u32 [#allocation8], 4
      %s31 = int_to_ptr.vmem [resolvable:$true] %s30
      %36 = dma.hbm_to_vmem [thread:$0]  %s1, 512, %s31, [#allocation9], 128, 128, 8
    $region9: #{tpu_custom_call.1} parent=1 // pred_fallthru
      _
    // Predicated region
    $region10: #{tpu_custom_call.1} parent=1 // pred_check
      _
    $region11: #{tpu_custom_call.1} parent=1 // pred_check_branch
      %38 = sbr.rel (0) target = $region13
    $region12: #{tpu_custom_call.1} parent=1 // pred_region
      _
    $region13: #{tpu_custom_call.1} parent=1 // pred_fallthru
      _
    // Predicated region
    $region14: #{tpu_custom_call.1} parent=1 // pred_check
      _
    $region15: #{tpu_custom_call.1} parent=1 // pred_check_branch
      %40 = sbr.rel (0) target = $region17
    $region16: #{tpu_custom_call.1} parent=1 // pred_region
      %s42 = ssub.s32 1024, 1024
      %43 = vsyncadd [#allocation9], %s42
      %s44 = sshll.u32 [#allocation10], 4
      %s45 = int_to_ptr.vmem [resolvable:$true] %s44
      %50 = dma.hbm_to_vmem [thread:$0]  %s3, 1024, %s45, [#allocation9], 128, 128, 8
    $region17: #{tpu_custom_call.1} parent=1 // pred_fallthru
      _
    // Predicated region
    $region18: #{tpu_custom_call.1} parent=1 // pred_check
      _
    $region19: #{tpu_custom_call.1} parent=1 // pred_check_branch
      %52 = sbr.rel (0) target = $region21
    $region20: #{tpu_custom_call.1} parent=1 // pred_region
      %s54 = ssub.s32 128, 128
      %55 = vsyncadd [#allocation12], %s54
      %s57 = sshll.u32 [#allocation11], 4
      %s58 = int_to_ptr.vmem [resolvable:$true] %s57
      %60 = dma.hbm_to_vmem [thread:$0]  %s4, 128, %s58, [#allocation12]
    $region21: #{tpu_custom_call.1} parent=1 // pred_fallthru
      _
    // Predicated region
    $region22: #{tpu_custom_call.1} parent=1 // pred_check
      _
    $region23: #{tpu_custom_call.1} parent=1 // pred_check_branch
      %62 = sbr.rel (0) target = $region25
    $region24: #{tpu_custom_call.1} parent=1 // pred_region
      _
    $region25: #{tpu_custom_call.1} parent=1 // pred_fallthru
      _
    // Predicated region
    $region26: #{tpu_custom_call.1} parent=1 // pred_check
      _
    $region27: #{tpu_custom_call.1} parent=1 // pred_check_branch
      %64 = sbr.rel (0) target = $region29
    $region28: #{tpu_custom_call.1} parent=1 // pred_region
      %65 = dma.done [#allocation6], 128
    $region29: #{tpu_custom_call.1} parent=1 // pred_fallthru
      _
    // Predicated region
    $region30: #{tpu_custom_call.1} parent=1 // pred_check
      _
    $region31: #{tpu_custom_call.1} parent=1 // pred_check_branch
      %67 = sbr.rel (0) target = $region33
    $region32: #{tpu_custom_call.1} parent=1 // pred_region
      %68 = dma.done [#allocation9], 512
    $region33: #{tpu_custom_call.1} parent=1 // pred_fallthru
      _
    // Predicated region
    $region34: #{tpu_custom_call.1} parent=1 // pred_check
      _
    $region35: #{tpu_custom_call.1} parent=1 // pred_check_branch
      %70 = sbr.rel (0) target = $region37
    $region36: #{tpu_custom_call.1} parent=1 // pred_region
      %71 = dma.done [#allocation9], 1024
    $region37: #{tpu_custom_call.1} parent=1 // pred_fallthru
      _
    // Predicated region
    $region38: #{tpu_custom_call.1} parent=1 // pred_check
      _
    $region39: #{tpu_custom_call.1} parent=1 // pred_check_branch
      %73 = sbr.rel (0) target = $region41
    $region40: #{tpu_custom_call.1} parent=1 // pred_region
      %74 = dma.done [#allocation12], 128
    $region41: #{tpu_custom_call.1} parent=1 // pred_fallthru
      _
    %p75 = scmp.eq.s32.totalorder 0, 0
    // Predicated region
    $region42: #{tpu_custom_call.1} parent=1 // pred_check
      %p76 = pneg %p75
    $region43: #{tpu_custom_call.1} parent=1 // pred_check_branch
      %78 = sbr.rel (%p76) target = $region45
    $region44: #{tpu_custom_call.1} parent=1 // pred_region
      %v79 = vld [vmem:[#allocation11] sm:$0xff]
      %vm80 = vcmask 64512
      %81 = vst.msk [vmem:[#allocation2] sm:$0xff] %vm80, %v79
    $region45: #{tpu_custom_call.1} parent=1 // pred_fallthru
      _
    %v82 = vld [vmem:[#allocation5] sm:$0xff]
    %v83 = vld [vmem:[#allocation8] sm:$0xff]
    %v84 = vld [vmem:[#allocation8 + $0x8] sm:$0xff]
    %v85 = vld [vmem:[#allocation8 + $0x10] sm:$0xff]
    %v86 = vld [vmem:[#allocation8 + $0x18] sm:$0xff]
    %v87 = vld [vmem:[%s2] sm:$0x1]
    %v89 = vlaneseq
    %v90 = vshrl.u32 %v89, 7
    %v91 = vsub.s32 0, %v90
    %v92 = vrot.slane %v87, %v91
    %vm94 = vcmask 261120
    %v96 = vsel %vm94, %v82, 0
    %98 = vmatprep.subr.mxu0 0.0
    %99 = vmatpush1.msra.mxu0 0.0
    %100 = vmatprep.subr.mxu0 0.0
    %101 = vmatpush1.msra.mxu0 0.0
    %102 = vmatprep.subr.mxu0 0.0
    %103 = vmatpush1.msra.mxu0 0.0
    %104 = vmatprep.subr.mxu0 0.0
    %105 = vmatpush1.msra.mxu0 0.0
    %106 = vmatprep.subr.mxu0 0.0
    %107 = vmatpush1.msra.mxu0 0.0
    %108 = vmatprep.subr.mxu0 0.0
    %109 = vmatpush1.msra.mxu0 0.0
    %110 = vmatprep.subr.mxu0 0.0
    %111 = vmatpush1.msra.mxu0 0.0
    %112 = vmatprep.subr.mxu0 0.0
    %113 = vmatpush1.msra.mxu0 0.0
    %114 = vmatprep.subr.mxu0 0.0
    %115 = vmatpush1.msra.mxu0 0.0
    %116 = vmatprep.subr.mxu0 0.0
    %117 = vmatpush1.msra.mxu0 0.0
    %118 = vmatprep.subr.mxu0 0.0
    %119 = vmatpush1.msra.mxu0 0.0
    %120 = vmatprep.subr.mxu0 0.0
    %121 = vmatpush1.msra.mxu0 0.0
    %122 = vmatprep.subr.mxu0 0.0
    %123 = vmatpush1.msra.mxu0 %v86
    %124 = vmatprep.subr.mxu0 0.0
    %125 = vmatpush1.msra.mxu0 %v85
    %126 = vmatprep.subr.mxu0 0.0
    %127 = vmatpush1.msra.mxu0 %v84
    %128 = vmatprep.subr.mxu0 0.0
    %129 = vmatpush1.msra.mxu0 %v83
    %130 = vmatprep.subr.mxu0 0.0
    %131 = vmatpush2.msra.mxu0 0.0
    %132 = vmatprep.subr.mxu0 0.0
    %133 = vmatpush2.msra.mxu0 0.0
    %134 = vmatprep.subr.mxu0 0.0
    %135 = vmatpush2.msra.mxu0 0.0
    %136 = vmatprep.subr.mxu0 0.0
    %137 = vmatpush2.msra.mxu0 0.0
    %138 = vmatprep.subr.mxu0 0.0
    %139 = vmatpush2.msra.mxu0 0.0
    %140 = vmatprep.subr.mxu0 0.0
    %141 = vmatpush2.msra.mxu0 0.0
    %142 = vmatprep.subr.mxu0 0.0
    %143 = vmatpush2.msra.mxu0 0.0
    %144 = vmatprep.subr.mxu0 0.0
    %145 = vmatpush2.msra.mxu0 0.0
    %146 = vmatprep.subr.mxu0 0.0
    %147 = vmatpush2.msra.mxu0 0.0
    %148 = vmatprep.subr.mxu0 0.0
    %149 = vmatpush2.msra.mxu0 0.0
    %150 = vmatprep.subr.mxu0 0.0
    %151 = vmatpush2.msra.mxu0 0.0
    %152 = vmatprep.subr.mxu0 0.0
    %153 = vmatpush2.msra.mxu0 0.0
    %154 = vmatprep.subr.mxu0 0.0
    %155 = vmatpush2.msra.mxu0 0.0
    %156 = vmatprep.subr.mxu0 0.0
    %157 = vmatpush2.msra.mxu0 0.0
    %158 = vmatprep.subr.mxu0 0.0
    %159 = vmatpush2.msra.mxu0 0.0
    %160 = vmatprep.subr.mxu0 0.0
    %161 = vmatpush2.msra.mxu0 0.0
    %162 = vmatprep.mubr.f32.mxu0 0.0
    %163 = vmatmul.mubr.f32.gmra.mxu0 %v96
    %v164 = vpop.f32.mrf.mxu0
    %v165 = vadd.f32 %v92, %v164
    %v166 = vpop.f32.mrf.mxu0
    %167 = vdwg.mxu0
    %v168 = vmax.f32 %v165, 0.0
    %vm169 = vcmp.ne.f32.partialorder %v165, %v165
    %v170 = vadd.f32 %v165, 0.0
    %v171 = vand.u32 2147483647, %v165
    %v172 = vsub.f32 0.0, %v171
    %v173 = vmul.f32 %v172, 1.442695
    %v174 = vpow.pop %v173
    %v175 = vadd.f32 %v174, 1.0
    %v176 = vlog2.pop %v175
    %v177 = vmul.f32 %v176, 0.6931472
    %v178 = vmul.f32 -0.5, %v174
    %v179 = vadd.f32 %v178, 1.0
    %v180 = vmul.f32 %v179, %v174
    %v181 = vand.u32 2147483647, %v174
    %vm182 = vcmp.lt.f32.partialorder %v181, 0.0004427343
    %v183 = vsel %vm182, %v180, %v177
    %v184 = vadd.f32 %v168, %v183
    %v185 = vsel %vm169, %v170, %v184
    %v186 = vxor.u32 %v165, 2147483648
    %v187 = vmul.f32 %v186, 1.442695
    %v188 = vpow.pop %v187
    %v189 = vadd.f32 %v188, 1.0
    %v190 = vrcp.pop %v189
    %v191 = vmul.f32 1.0, %v190
    %vm192 = vcmask 171152
    %v193 = vsel %vm192, %v165, -inf
    %194 = vmax.xlane.f32.xlu0 %v193
    %v195 = vpop.xlane.xlu0 %194
    %v196 = vsub.f32 %v165, %v195
    %v197 = vmul.f32 %v196, 1.442695
    %v198 = vpow.pop %v197
    %200 = vrot.lane.b32.xlu0 %v198, 110
    %v201 = vpop.permute.xlu0 %200
    %vm203 = vcmask 23552
    %v204 = vsel %vm203, %v201, 0.0
    %205 = vadd.xlane.f32.xlu0 %v204
    %v206 = vpop.xlane.xlu0 %205
    %v207 = vrcp.pop %v206
    %v208 = vmul.f32 %v198, %v207
    %v209 = vadd.f32 %v168, 1.0
    %v210 = vld [vmem:[#allocation10] sm:$0xff]
    %v211 = vld [vmem:[#allocation10 + $0x8] sm:$0xff]
    %v212 = vld [vmem:[#allocation10 + $0x10] sm:$0xff]
    %v213 = vld [vmem:[#allocation10 + $0x18] sm:$0xff]
    %v214 = vld [vmem:[#allocation10 + $0x20] sm:$0xff]
    %v215 = vld [vmem:[#allocation10 + $0x28] sm:$0xff]
    %v216 = vld [vmem:[#allocation10 + $0x30] sm:$0xff]
    %v217 = vld [vmem:[#allocation10 + $0x38] sm:$0xff]
    %v219 = vcombine.high %v168, %v168
    %v221 = vunpack.c.l.s4 1966171168
    %v222 = vunpack.c.0.s8 %v221
    %v223 = vlaneseq
    %v224 = vshrl.u32 %v223, 7
    %v225 = vsub.s32 %v222, %v224
    %v226 = vrot.slane %v168, %v225
    %v228 = vunpack.c.l.s4 1966171168
    %v229 = vunpack.c.0.s8 %v228
    %v230 = vlaneseq
    %v231 = vshrl.u32 %v230, 7
    %v232 = vsub.s32 %v229, %v231
    %v233 = vrot.slane %v219, %v232
    %v234 = vcombine.high %v226, %v226
    %v235 = vcombine.high %v233, %v233
    %v237 = vunpack.c.l.s4 1966171168
    %v238 = vunpack.c.0.s8 %v237
    %v239 = vlaneseq
    %v240 = vshrl.u32 %v239, 7
    %v241 = vsub.s32 %v238, %v240
    %v242 = vrot.slane %v226, %v241
    %v244 = vunpack.c.l.s4 1966171168
    %v245 = vunpack.c.0.s8 %v244
    %v246 = vlaneseq
    %v247 = vshrl.u32 %v246, 7
    %v248 = vsub.s32 %v245, %v247
    %v249 = vrot.slane %v233, %v248
    %v251 = vunpack.c.l.s4 1966171168
    %v252 = vunpack.c.0.s8 %v251
    %v253 = vlaneseq
    %v254 = vshrl.u32 %v253, 7
    %v255 = vsub.s32 %v252, %v254
    %v256 = vrot.slane %v234, %v255
    %v258 = vunpack.c.l.s4 1966171168
    %v259 = vunpack.c.0.s8 %v258
    %v260 = vlaneseq
    %v261 = vshrl.u32 %v260, 7
    %v262 = vsub.s32 %v259, %v261
    %v263 = vrot.slane %v235, %v262
    %v264 = vcombine.high %v242, %v242
    %v265 = vcombine.high %v249, %v249
    %v266 = vcombine.high %v256, %v256
    %v267 = vcombine.high %v263, %v263
    %v268 = vlaneseq
    %v269 = vshrl.u32 %v268, 7
    %v270 = vsub.s32 0, %v269
    %v271 = vrot.slane %v242, %v270
    %v272 = vlaneseq
    %v273 = vshrl.u32 %v272, 7
    %v274 = vsub.s32 0, %v273
    %v275 = vrot.slane %v256, %v274
    %v276 = vlaneseq
    %v277 = vshrl.u32 %v276, 7
    %v278 = vsub.s32 0, %v277
    %v279 = vrot.slane %v264, %v278
    %v280 = vlaneseq
    %v281 = vshrl.u32 %v280, 7
    %v282 = vsub.s32 0, %v281
    %v283 = vrot.slane %v266, %v282
    %v284 = vlaneseq
    %v285 = vshrl.u32 %v284, 7
    %v286 = vsub.s32 0, %v285
    %v287 = vrot.slane %v249, %v286
    %v288 = vlaneseq
    %v289 = vshrl.u32 %v288, 7
    %v290 = vsub.s32 0, %v289
    %v291 = vrot.slane %v263, %v290
    %v292 = vlaneseq
    %v293 = vshrl.u32 %v292, 7
    %v294 = vsub.s32 0, %v293
    %v295 = vrot.slane %v265, %v294
    %v296 = vlaneseq
    %v297 = vshrl.u32 %v296, 7
    %v298 = vsub.s32 0, %v297
    %v299 = vrot.slane %v267, %v298
    %v308 = vmul.f32 %v271, %v210
    %v309 = vmul.f32 %v275, %v211
    %v310 = vmul.f32 %v279, %v212
    %v311 = vmul.f32 %v283, %v213
    %v312 = vmul.f32 %v287, %v214
    %v313 = vmul.f32 %v291, %v215
    %v314 = vmul.f32 %v295, %v216
    %v315 = vmul.f32 %v299, %v217
    %vm316 = vcmask 130048
    %v317 = vsel %vm316, %v308, 0.0
    %318 = vadd.xlane.f32.xlu0 %v317
    %v319 = vpop.xlane.xlu0 %318
    %v320 = vsel %vm316, %v309, 0.0
    %321 = vadd.xlane.f32.xlu0 %v320
    %v322 = vpop.xlane.xlu0 %321
    %v323 = vsel %vm316, %v310, 0.0
    %324 = vadd.xlane.f32.xlu0 %v323
    %v325 = vpop.xlane.xlu0 %324
    %v326 = vsel %vm316, %v311, 0.0
    %327 = vadd.xlane.f32.xlu0 %v326
    %v328 = vpop.xlane.xlu0 %327
    %v329 = vsel %vm316, %v312, 0.0
    %330 = vadd.xlane.f32.xlu0 %v329
    %v331 = vpop.xlane.xlu0 %330
    %v332 = vsel %vm316, %v313, 0.0
    %333 = vadd.xlane.f32.xlu0 %v332
    %v334 = vpop.xlane.xlu0 %333
    %v335 = vsel %vm316, %v314, 0.0
    %336 = vadd.xlane.f32.xlu0 %v335
    %v337 = vpop.xlane.xlu0 %336
    %v338 = vsel %vm316, %v315, 0.0
    %339 = vadd.xlane.f32.xlu0 %v338
    %v340 = vpop.xlane.xlu0 %339
    %v341 = vmul.f32 %v168, %v168
    %v342 = vsel %vm316, %v341, 0.0
    %343 = vadd.xlane.f32.xlu0 %v342
    %v344 = vpop.xlane.xlu0 %343
    %v345 = vrsqrt.pop %v344
    %v346 = vmul.f32 %v344, %v345
    %vm347 = vcmp.eq.f32.partialorder %v344, inf
    %v348 = vsel %vm347, %v344, %v346
    %vm349 = vcmp.eq.f32.partialorder %v344, 0.0
    %v350 = vand.u32 %v344, 2147483648
    %v351 = vsel %vm349, %v350, %v348
    %v352 = vmax.f32 %v351, 1e-08
    %v353 = vrcp.pop %v352
    %v355 = vlaneseq
    %v356 = vshrl.u32 %v355, 7
    %v357 = vsub.s32 0, %v356
    %v358 = vrot.slane %v353, %v357
    %v359 = vlaneseq
    %v360 = vshrl.u32 %v359, 7
    %v361 = vsub.s32 1, %v360
    %v362 = vrot.slane %v353, %v361
    %v363 = vlaneseq
    %v364 = vshrl.u32 %v363, 7
    %v365 = vsub.s32 2, %v364
    %v366 = vrot.slane %v353, %v365
    %v367 = vlaneseq
    %v368 = vshrl.u32 %v367, 7
    %v369 = vsub.s32 3, %v368
    %v370 = vrot.slane %v353, %v369
    %v371 = vlaneseq
    %v372 = vshrl.u32 %v371, 7
    %v373 = vsub.s32 4, %v372
    %v374 = vrot.slane %v353, %v373
    %v375 = vlaneseq
    %v376 = vshrl.u32 %v375, 7
    %v377 = vsub.s32 5, %v376
    %v378 = vrot.slane %v353, %v377
    %v379 = vlaneseq
    %v380 = vshrl.u32 %v379, 7
    %v381 = vsub.s32 6, %v380
    %v382 = vrot.slane %v353, %v381
    %v383 = vlaneseq
    %v384 = vshrl.u32 %v383, 7
    %v385 = vsub.s32 7, %v384
    %v386 = vrot.slane %v353, %v385
    %v395 = vmul.f32 %v319, %v358
    %v396 = vmul.f32 %v322, %v362
    %v397 = vmul.f32 %v325, %v366
    %v398 = vmul.f32 %v328, %v370
    %v399 = vmul.f32 %v331, %v374
    %v400 = vmul.f32 %v334, %v378
    %v401 = vmul.f32 %v337, %v382
    %v402 = vmul.f32 %v340, %v386
    %v403 = vld [vmem:[%s5] sm:$0xff]
    %v405 = vlaneseq
    %v406 = vshrl.u32 %v405, 7
    %v407 = vsub.s32 0, %v406
    %v408 = vrot.slane %v403, %v407
    %410 = vbcast.lane.b32.xlu0 %v408, 256
    %v411 = vpop.permute.xlu0 %410
    %v412 = vlaneseq
    %v413 = vshrl.u32 %v412, 7
    %v414 = vsub.s32 1, %v413
    %v415 = vrot.slane %v403, %v414
    %417 = vbcast.lane.b32.xlu0 %v415, 256
    %v418 = vpop.permute.xlu0 %417
    %v419 = vlaneseq
    %v420 = vshrl.u32 %v419, 7
    %v421 = vsub.s32 2, %v420
    %v422 = vrot.slane %v403, %v421
    %424 = vbcast.lane.b32.xlu0 %v422, 256
    %v425 = vpop.permute.xlu0 %424
    %v426 = vlaneseq
    %v427 = vshrl.u32 %v426, 7
    %v428 = vsub.s32 3, %v427
    %v429 = vrot.slane %v403, %v428
    %431 = vbcast.lane.b32.xlu0 %v429, 256
    %v432 = vpop.permute.xlu0 %431
    %v433 = vlaneseq
    %v434 = vshrl.u32 %v433, 7
    %v435 = vsub.s32 4, %v434
    %v436 = vrot.slane %v403, %v435
    %438 = vbcast.lane.b32.xlu0 %v436, 256
    %v439 = vpop.permute.xlu0 %438
    %v440 = vlaneseq
    %v441 = vshrl.u32 %v440, 7
    %v442 = vsub.s32 5, %v441
    %v443 = vrot.slane %v403, %v442
    %445 = vbcast.lane.b32.xlu0 %v443, 256
    %v446 = vpop.permute.xlu0 %445
    %v447 = vlaneseq
    %v448 = vshrl.u32 %v447, 7
    %v449 = vsub.s32 6, %v448
    %v450 = vrot.slane %v403, %v449
    %452 = vbcast.lane.b32.xlu0 %v450, 256
    %v453 = vpop.permute.xlu0 %452
    %v454 = vlaneseq
    %v455 = vshrl.u32 %v454, 7
    %v456 = vsub.s32 7, %v455
    %v457 = vrot.slane %v403, %v456
    %459 = vbcast.lane.b32.xlu0 %v457, 256
    %v460 = vpop.permute.xlu0 %459
    %v469 = vmul.f32 %v395, %v411
    %v470 = vmul.f32 %v396, %v418
    %v471 = vmul.f32 %v397, %v425
    %v472 = vmul.f32 %v398, %v432
    %v473 = vmul.f32 %v399, %v439
    %v474 = vmul.f32 %v400, %v446
    %v475 = vmul.f32 %v401, %v453
    %v476 = vmul.f32 %v402, %v460
    %478 = vset.pattern.permute.xlu0 16
    %479 = vperm.xlu0 %478, %v185
    %v480 = vpop.permute.xlu0 %479
    %490 = vset.pattern.permute.xlu0 0
    %491 = vperm.xlu0 %490, %v469
    %v492 = vpop.permute.xlu0 %491
    %493 = vset.pattern.permute.xlu0 0
    %494 = vperm.xlu0 %493, %v470
    %v495 = vpop.permute.xlu0 %494
    %496 = vset.pattern.permute.xlu0 0
    %497 = vperm.xlu0 %496, %v471
    %v498 = vpop.permute.xlu0 %497
    %499 = vset.pattern.permute.xlu0 0
    %500 = vperm.xlu0 %499, %v472
    %v501 = vpop.permute.xlu0 %500
    %502 = vset.pattern.permute.xlu0 0
    %503 = vperm.xlu0 %502, %v473
    %v504 = vpop.permute.xlu0 %503
    %505 = vset.pattern.permute.xlu0 0
    %506 = vperm.xlu0 %505, %v474
    %v507 = vpop.permute.xlu0 %506
    %508 = vset.pattern.permute.xlu0 0
    %509 = vperm.xlu0 %508, %v475
    %v510 = vpop.permute.xlu0 %509
    %511 = vset.pattern.permute.xlu0 0
    %512 = vperm.xlu0 %511, %v476
    %v513 = vpop.permute.xlu0 %512
    %v514 = vlaneseq
    %v515 = vand.u32 %v514, 127
    %v516 = vlaneseq
    %v517 = vshrl.u32 %v516, 7
    %v518 = vsub.s32 %v515, %v517
    %v519 = vrot.slane %v492, %v518
    %v520 = vlaneseq
    %v521 = vshrl.u32 %v520, 7
    %v522 = vsub.s32 %v515, %v521
    %v523 = vrot.slane %v495, %v522
    %v524 = vlaneseq
    %v525 = vshrl.u32 %v524, 7
    %v526 = vsub.s32 %v515, %v525
    %v527 = vrot.slane %v498, %v526
    %v528 = vlaneseq
    %v529 = vshrl.u32 %v528, 7
    %v530 = vsub.s32 %v515, %v529
    %v531 = vrot.slane %v501, %v530
    %v532 = vlaneseq
    %v533 = vshrl.u32 %v532, 7
    %v534 = vsub.s32 %v515, %v533
    %v535 = vrot.slane %v504, %v534
    %v536 = vlaneseq
    %v537 = vshrl.u32 %v536, 7
    %v538 = vsub.s32 %v515, %v537
    %v539 = vrot.slane %v507, %v538
    %v540 = vlaneseq
    %v541 = vshrl.u32 %v540, 7
    %v542 = vsub.s32 %v515, %v541
    %v543 = vrot.slane %v510, %v542
    %v544 = vlaneseq
    %v545 = vshrl.u32 %v544, 7
    %v546 = vsub.s32 %v515, %v545
    %v547 = vrot.slane %v513, %v546
    %vm548 = vcmask 1041409
    %v549 = vsel %vm548, %v523, %v519
    %vm550 = vcmask 1042434
    %v551 = vsel %vm550, %v527, %v549
    %vm552 = vcmask 1043459
    %v553 = vsel %vm552, %v531, %v551
    %vm554 = vcmask 1044484
    %v555 = vsel %vm554, %v535, %v553
    %vm556 = vcmask 1045509
    %v557 = vsel %vm556, %v539, %v555
    %vm558 = vcmask 1046534
    %v559 = vsel %vm558, %v543, %v557
    %vm560 = vcmask 1047559
    %v561 = vsel %vm560, %v547, %v559
    %v563 = vmul.f32 %v480, %v561
    %vm564 = vcmask 64512
    %v565 = vsel %vm564, %v563, -inf
    %566 = vmax.xlane.f32.xlu0 %v565
    %v567 = vpop.xlane.xlu0 %566
    %v568 = vsub.f32 %v563, %v567
    %v569 = vmul.f32 %v568, 1.442695
    %v570 = vpow.pop %v569
    %v571 = vsel %vm564, %v570, 0.0
    %572 = vadd.xlane.f32.xlu0 %v571
    %v573 = vpop.xlane.xlu0 %572
    %v574 = vrcp.pop %v573
    %v575 = vmul.f32 %v570, %v574
    %576 = vst.msk [vmem:[#allocation3] sm:$0xff] %vm564, %v575
    %578 = vrot.lane.b32.xlu0 %v208, 110
    %v579 = vpop.permute.xlu0 %578
    %582 = vrot.lane.b32.xlu0 %v191, 114
    %v583 = vpop.permute.xlu0 %582
    %586 = vrot.lane.b32.xlu0 %v209, 111
    %v587 = vpop.permute.xlu0 %586
    %v589 = vsel %vm203, %v579, %v583
    %vm590 = vcmask 31744
    %v591 = vsel %vm590, %v589, %v587
    %vm592 = vcmask 39936
    %593 = vst.msk [vmem:[#allocation4] sm:$0xff] %vm592, %v591
    %v594 = vld [vmem:[#allocation2] sm:$0xff]
    %v595 = vld [vmem:[#allocation3] sm:$0xff]
    %v596 = vld [vmem:[#allocation4] sm:$0xff]
    %598 = vset.pattern.permute.xlu0 3
    %599 = vperm.xlu0 %598, %v596
    %v600 = vpop.permute.xlu0 %599
    %v602 = vmul.f32 %v600, %v595
    %v603 = vsub.f32 1.0, %v596
    %605 = vset.pattern.permute.xlu0 3
    %606 = vperm.xlu0 %605, %v603
    %v607 = vpop.permute.xlu0 %606
    %v609 = vmul.f32 %v607, %v594
    %v610 = vadd.f32 %v602, %v609
    %vm611 = vcmask 1047616
    %612 = vrot.lane.b32.xlu0 %v610, 8
    %v613 = vpop.permute.xlu0 %612
    %v614 = vsel %vm611, %v613, %v610
    %615 = vrot.lane.b32.xlu0 %v614, 8
    %v616 = vpop.permute.xlu0 %615
    %v617 = vsel %vm611, %v616, %v610
    %618 = vset.pattern.permute.xlu0 0
    %619 = vperm.xlu0 %618, %v596
    %v620 = vpop.permute.xlu0 %619
    %v622 = vmul.f32 %v620, %v617
    %v623 = vadd.f32 %v622, 0.0
    %624 = vset.pattern.permute.xlu0 1
    %625 = vperm.xlu0 %624, %v596
    %v626 = vpop.permute.xlu0 %625
    %v628 = vmul.f32 %v626, %v610
    %630 = vrot.lane.b32.xlu0 %v628, 7
    %v631 = vpop.permute.xlu0 %630
    %v633 = vadd.f32 %v623, %v631
    %634 = vset.pattern.permute.xlu0 2
    %635 = vperm.xlu0 %634, %v596
    %v636 = vpop.permute.xlu0 %635
    %v638 = vmul.f32 %v636, %v617
    %640 = vrot.lane.b32.xlu0 %v638, 6
    %v641 = vpop.permute.xlu0 %640
    %v643 = vadd.f32 %v633, %v641
    %v644 = vmax.f32 %v643, 1e-30
    %v645 = vlog2.pop %v644
    %v646 = vmul.f32 %v645, 0.6931472
    %647 = vset.pattern.permute.xlu0 4
    %648 = vperm.xlu0 %647, %v596
    %v649 = vpop.permute.xlu0 %648
    %v651 = vmul.f32 %v649, %v646
    %v652 = vmul.f32 %v651, 1.442695
    %v653 = vpow.pop %v652
    %655 = vrot.lane.b32.xlu0 %v653, 121
    %v656 = vpop.permute.xlu0 %655
    %v658 = vsel %vm564, %v656, 0.0
    %659 = vadd.xlane.f32.xlu0 %v658
    %v660 = vpop.xlane.xlu0 %659
    %v661 = vrcp.pop %v660
    %v662 = vmul.f32 %v653, %v661
    %664 = vrot.lane.b32.xlu0 %v662, 121
    %v665 = vpop.permute.xlu0 %664
    %667 = vst.msk [vmem:[#allocation13] sm:$0xff] %vm564, %v665
    %668 = vst.msk [vmem:[#allocation2] sm:$0xff] %vm564, %v665
    // Predicated region
    $region46: #{tpu_custom_call.1} parent=1 // pred_check
      _
    $region47: #{tpu_custom_call.1} parent=1 // pred_check_branch
      %670 = sbr.rel (0) target = $region49
    $region48: #{tpu_custom_call.1} parent=1 // pred_region
      %s672 = ssub.s32 128, 128
      %673 = vsyncadd [#allocation7], %s672
      %s675 = sshll.u32 [#allocation13], 4
      %s676 = int_to_ptr.vmem [resolvable:$true] %s675
      %678 = dma.vmem_to_hbm [thread:$0]  %s676, 128, %s6, [#allocation7]
    $region49: #{tpu_custom_call.1} parent=1 // pred_fallthru
      _
    // Predicated region
    $region50: #{tpu_custom_call.1} parent=1 // pred_check
      _
    $region51: #{tpu_custom_call.1} parent=1 // pred_check_branch
      %680 = sbr.rel (0) target = $region53
    $region52: #{tpu_custom_call.1} parent=1 // pred_region
      %681 = dma.done [#allocation7], 128
    $region53: #{tpu_custom_call.1} parent=1 // pred_fallthru
      _
    %682 = vsyncpa [#allocation6], 1
    %683 = vsyncpa [#allocation9], 1
    %684 = vsyncpa [#allocation12], 1
    %685 = vsyncpa [#allocation7], 1

</llo_original>
